<compile_context>
chip_gen: v7x
topology: tpu7x:2x2x1
jax: 0.10.0
libtpu: 0.0.40
codegen_flags: <defaults>
</compile_context>

<pallas_src>
import math

import jax
import jax.numpy as jnp
from jax.experimental import pallas as pl
from jax.experimental.pallas import tpu as pltpu


def _scaling_kernel(logs_ref, x_ref, out_ref):
    # logs_ref: (1, Dc) — same block index along the row axis, stays resident.
    # x_ref / out_ref: (tb, Dc) streamed tiles.
    scale = jnp.exp(logs_ref[...].astype(jnp.float32))               # EUP exp, f32
    out_ref[...] = (x_ref[...].astype(jnp.float32) * scale).astype(out_ref.dtype)


def _lane_pack_factor(d: int) -> int:
    # Smallest p such that p * d is a multiple of 128 (vreg lane width).
    return 128 // math.gcd(d, 128)


def scaling_layer_forward(x, log_scale_vector, *, target_tile_bytes=4 * 1024 * 1024):
    """x: (B, D), log_scale_vector: (1, D) -> (exp(logs) * x, sum(logs))."""
    B, D = x.shape
    assert log_scale_vector.shape == (1, D)
    itemsize = x.dtype.itemsize

    # Scalar log-det-Jacobian: trivial (1, D) reduction — off the per-tile
    # kernel path.
    log_det_jacobian = jnp.sum(log_scale_vector)

    # ---- Lane-dense packed layout: fold p consecutive batch rows into the
    # lane axis so the kernel's last dim is a multiple of 128.
    p = _lane_pack_factor(D)
    Dp = p * D                                   # multiple of 128 by construction

    # Pad only if B is not a multiple of p (pads < p rows; usually a no-op).
    B_pad = pl.cdiv(B, p) * p
    x_p = x if B_pad == B else jnp.pad(x, ((0, B_pad - B), (0, 0)))
    rows = B_pad // p
    x_packed = x_p.reshape(rows, Dp)             # row-major: free reshape
    logs_packed = jnp.tile(log_scale_vector, (1, p))   # (1, Dp)

    # Sublane packing for the dtype: 8 for f32, 16 for bf16, 32 for int8/fp8.
    sub = max(8, 32 // itemsize)

    # ---- Tile sizing.
    row_bytes = Dp * itemsize
    if sub * row_bytes > target_tile_bytes:
        # Large-D path: even the minimum-height block is too big — stream the
        # lane axis too, in multiple-of-128 chunks.
        tb = sub
        Dc = max(128, (target_tile_bytes // (sub * itemsize)) // 128 * 128)
    else:
        Dc = Dp
        # As many rows as fit ~target_tile_bytes per buffer (each of x / out is
        # double-buffered by the auto-pipeline) ...
        tb = max(sub, min(rows, target_tile_bytes // row_bytes))
        # ... but keep several grid steps so the pipeline overlaps and both
        # TensorCores get work on v7x.
        tb = min(tb, max(sub, pl.cdiv(rows, 8)))
        # Round down to the sublane-packing multiple.
        tb = max(sub, (tb // sub) * sub)

    grid = (pl.cdiv(rows, tb), pl.cdiv(Dp, Dc))  # partial edge blocks are masked

    out_packed = pl.pallas_call(
        _scaling_kernel,
        out_shape=jax.ShapeDtypeStruct((rows, Dp), x.dtype),
        grid=grid,
        in_specs=[
            pl.BlockSpec((1, Dc), lambda i, j: (0, j)),    # resident scale vector
            pl.BlockSpec((tb, Dc), lambda i, j: (i, j)),   # streamed x tiles
        ],
        out_specs=pl.BlockSpec((tb, Dc), lambda i, j: (i, j)),
        compiler_params=pltpu.CompilerParams(
            dimension_semantics=("parallel", "parallel"),
            vmem_limit_bytes=32 * 1024 * 1024,
        ),
    )(logs_packed, x_packed)

    log_likelihood = out_packed.reshape(B_pad, D)
    if B_pad != B:
        log_likelihood = log_likelihood[:B]
    return log_likelihood, log_det_jacobian


if __name__ == "__main__":
    key = jax.random.PRNGKey(0)
    k_param, k_x = jax.random.split(key)

    # Small shapes consistent with the module: batch=40, input_dim=32.
    # (Exercises lane packing p=4, a multi-step grid, and a masked final block.)
    B, D = 40, 32
    log_scale_vector = jax.random.normal(k_param, (1, D), dtype=jnp.float32)
    x = jax.random.normal(k_x, (B, D), dtype=jnp.float32)

    log_likelihood, log_det_jacobian = scaling_layer_forward(x, log_scale_vector)
    jax.block_until_ready((log_likelihood, log_det_jacobian))

    # Reference check in plain JAX.
    ref_out = jnp.exp(log_scale_vector) * x
    ref_ldj = jnp.sum(log_scale_vector)
    assert jnp.allclose(log_likelihood, ref_out, atol=1e-6, rtol=1e-6)
    assert jnp.allclose(log_det_jacobian, ref_ldj, atol=1e-6, rtol=1e-6)

    print("KERNEL_OK")
</pallas_src>

<mosaic_0001>
module attributes {stable_mosaic.version = 11 : i64} {
  func.func @_scaling_kernel(%arg0: i32, %arg1: i32, %arg2: memref<1x128xf32, #tpu.memory_space<vmem>>, %arg3: memref<8x128xf32, #tpu.memory_space<vmem>>, %arg4: memref<8x128xf32, #tpu.memory_space<vmem>>) attributes {dimension_semantics = [#tpu.dimension_semantics<parallel>, #tpu.dimension_semantics<parallel>], iteration_bounds = array<i64: 2, 1>, scalar_prefetch = 0 : i64, scratch_operands = 0 : i64, tpu.core_type = #tpu.core_type<tc>, window_params = [{transform_indices = @transform_0, window_bounds = array<i64: 1, 128>}, {transform_indices = @transform_1, window_bounds = array<i64: 8, 128>}, {transform_indices = @transform_2, window_bounds = array<i64: 8, 128>}]} {
    %c0 = arith.constant 0 : index
    %c0_0 = arith.constant 0 : index
    %0 = vector.load %arg2[%c0, %c0_0] : memref<1x128xf32, #tpu.memory_space<vmem>>, vector<1x128xf32>
    %1 = math.exp %0 : vector<1x128xf32>
    %c0_1 = arith.constant 0 : index
    %c0_2 = arith.constant 0 : index
    %2 = vector.load %arg3[%c0_1, %c0_2] : memref<8x128xf32, #tpu.memory_space<vmem>>, vector<8x128xf32>
    %3 = vector.broadcast %1 : vector<1x128xf32> to vector<8x128xf32>
    %4 = arith.mulf %2, %3 : vector<8x128xf32>
    %c0_3 = arith.constant 0 : index
    %c0_4 = arith.constant 0 : index
    %5 = vector.load %arg4[%c0_3, %c0_4] : memref<8x128xf32, #tpu.memory_space<vmem>>, vector<8x128xf32>
    tpu.vector_store %arg4[%c0_3, %c0_4], %4 {strides = array<i32>} : memref<8x128xf32, #tpu.memory_space<vmem>>, vector<8x128xf32>,
    return
  }
  func.func @transform_0(%arg0: i32, %arg1: i32) -> (i32, i32) {
    %c0_i32 = arith.constant 0 : i32
    %c0_i32_0 = arith.constant 0 : i32
    return %c0_i32, %arg1 : i32, i32
  }
  func.func @transform_1(%arg0: i32, %arg1: i32) -> (i32, i32) {
    %c0_i32 = arith.constant 0 : i32
    return %arg0, %arg1 : i32, i32
  }
  func.func @transform_2(%arg0: i32, %arg1: i32) -> (i32, i32) {
    %c0_i32 = arith.constant 0 : i32
    return %arg0, %arg1 : i32, i32
  }
}

</mosaic_0001>

<llo_original>
// kernel: tpu_custom_call.1
$region0: #{tpu_custom_call.1}
  #allocation0 [shape = 'u32[]', space=smem, size = 0x4, offset = 0x4, fixed_abs, tag = 'smem constant byte address 0x4 - core index']
  #allocation1 [shape = 'u32[144,128]{1,0:T(1,128)}', space=vmem, size = 0x12000, scoped, tag = 'internal scratch']
  %s0 = inlined_call_operand.hbm [shape: f32[1,128], index: 0, kind: input, shape index: {}]
  %s1 = inlined_call_operand.hbm [shape: f32[10,128], index: 1, kind: input, shape index: {}]
  %s2 = inlined_call_operand.hbm [shape: f32[10,128], index: 2, kind: output, shape index: {}]
  %s3 = sld [smem:[#allocation0]]
  $region49: #{tpu_custom_call.1} parent=0
    _
  %s5 = ssub.s32 1, %s3
  %s6 = scalar_select 0, %s5, %s3
  $region1: #{tpu_custom_call.1} parent=0
    #allocation2 [shape = 'u8[512]{0}', space=vmem, size = 0x400, scoped, tag = 'input window, operand 0, single buffered']
    #allocation3 [shape = 's32[2]{0}', space=sflag, size = 0x8, scoped, tag = 'scoped memory for tpu_custom_call.1']
    #allocation4 [shape = 's32[2]{0}', space=sflag, size = 0x8, scoped, tag = 'scoped memory for tpu_custom_call.1']
    #allocation5 [shape = 'u8[8192]{0}', space=vmem, size = 0x2000, scoped, tag = 'input window, operand 1']
    #allocation6 [shape = 's32[2]{0}', space=sflag, size = 0x8, scoped, tag = 'scoped memory for tpu_custom_call.1']
    #allocation7 [shape = 'u8[8192]{0}', space=vmem, size = 0x2000, scoped, tag = 'output window, operand 0']
    %7 = vsyncpa [#allocation3], 0
    %8 = vsyncpa [#allocation6], 0
    %s9 = scalar_lea.sflag [#allocation6], 1
    %10 = vsyncpa %s9, 0
    %11 = vsyncpa [#allocation4], 0
    %s12 = scalar_lea.sflag [#allocation4], 1
    %13 = vsyncpa %s12, 0
    loop: start=0, step=1, limit=4
    $region2: #{tpu_custom_call.1} parent=1 // loop_pre_header
      _
    $region3: #{tpu_custom_call.1} parent=1 // loop_header
      %s15 = sphi 0, %s19
      %p16 = scmp.ge.s32.totalorder %s15, 4
      %s22 = sphi 0, %s34
      %s23 = sphi 0, %s30
      %s24 = sphi 0, %s22
      %s25 = sphi 0, %s23
      %s26 = sphi 0, %s24
      %s27 = sphi 0, %s25
      %s37 = sphi 0, %s39
      %s40 = sphi 0, %s37
      %s41 = sphi 0, %s40
      %s57 = sphi 0, %s41
      %s65 = sphi 0, %s67
      %s68 = sphi 0, %s65
      %s69 = sphi 0, %s68
      %s85 = sphi 0, %s69
      %s93 = sphi 0, %s95
      %s96 = sphi 0, %s93
      %s97 = sphi 0, %s96
      %s113 = sphi 0, %s97
    $region4: #{tpu_custom_call.1} parent=1 // loop_header_branch
      %18 = sbr.rel (%p16) target = $region8
    $region5: #{tpu_custom_call.1} parent=1 // loop_body
      %s20 = ssub.s32 %s15, 1
      %s21 = ssub.s32 %s15, 2
      %s28 = sadd.s32 1, %s23
      %p29 = scmp.ge.s32.totalorder %s28, 1
      %s30 = scalar_select %p29, 0, %s28
      %s31 = sadd.s32 1, %s22
      %s32 = scalar_select %p29, %s31, %s22
      %p33 = scmp.ge.s32.totalorder %s32, 2
      %s34 = scalar_select %p33, 0, %s32
      %s35 = ssub.s32 %s23, %s30
      %p36 = scmp.eq.s32.totalorder %s35, 0
      %s38 = sadd.s32 %s37, 1
      %s39 = scalar_select %p36, %s37, %s38
      %p42 = pneg %p36
      %p43 = scmp.eq.s32.totalorder %s15, 1
      %p44 = por %p42, %p43
      %p45 = scmp.ne.s32.totalorder %s37, %s40
      %p46 = scmp.eq.s32.totalorder %s15, 0
      %p47 = por %p45, %p46
      %p48 = scmp.ne.s32.totalorder %s37, %s40
      %p49 = scmp.eq.s32.totalorder %s20, 1
      %p50 = por %p48, %p49
      %p51 = scmp.ne.s32.totalorder %s40, %s41
      %p52 = scmp.eq.s32.totalorder %s20, 0
      %p53 = por %p51, %p52
      %p54 = scmp.ne.s32.totalorder %s40, %s41
      %p55 = scmp.eq.s32.totalorder %s21, 1
      %p56 = por %p54, %p55
      %p58 = scmp.ne.s32.totalorder %s41, %s57
      %p59 = scmp.eq.s32.totalorder %s21, 0
      %p60 = por %p58, %p59
      %s61 = ssub.s32 %s22, %s34
      %s62 = ssub.s32 %s23, %s30
      %s63 = sor.u32 %s61, %s62
      %p64 = scmp.eq.s32.totalorder %s63, 0
      %s66 = sadd.s32 %s65, 1
      %s67 = scalar_select %p64, %s65, %s66
      %p70 = pneg %p64
      %p71 = scmp.eq.s32.totalorder %s15, 1
      %p72 = por %p70, %p71
      %p73 = scmp.ne.s32.totalorder %s65, %s68
      %p74 = scmp.eq.s32.totalorder %s15, 0
      %p75 = por %p73, %p74
      %p76 = scmp.ne.s32.totalorder %s65, %s68
      %p77 = scmp.eq.s32.totalorder %s20, 1
      %p78 = por %p76, %p77
      %p79 = scmp.ne.s32.totalorder %s68, %s69
      %p80 = scmp.eq.s32.totalorder %s20, 0
      %p81 = por %p79, %p80
      %p82 = scmp.ne.s32.totalorder %s68, %s69
      %p83 = scmp.eq.s32.totalorder %s21, 1
      %p84 = por %p82, %p83
      %p86 = scmp.ne.s32.totalorder %s69, %s85
      %p87 = scmp.eq.s32.totalorder %s21, 0
      %p88 = por %p86, %p87
      %s89 = ssub.s32 %s22, %s34
      %s90 = ssub.s32 %s23, %s30
      %s91 = sor.u32 %s89, %s90
      %p92 = scmp.eq.s32.totalorder %s91, 0
      %s94 = sadd.s32 %s93, 1
      %s95 = scalar_select %p92, %s93, %s94
      %p98 = pneg %p92
      %p99 = scmp.eq.s32.totalorder %s15, 1
      %p100 = por %p98, %p99
      %p101 = scmp.ne.s32.totalorder %s93, %s96
      %p102 = scmp.eq.s32.totalorder %s15, 0
      %p103 = por %p101, %p102
      %p104 = scmp.ne.s32.totalorder %s93, %s96
      %p105 = scmp.eq.s32.totalorder %s20, 1
      %p106 = por %p104, %p105
      %p107 = scmp.ne.s32.totalorder %s96, %s97
      %p108 = scmp.eq.s32.totalorder %s20, 0
      %p109 = por %p107, %p108
      %p110 = scmp.ne.s32.totalorder %s96, %s97
      %p111 = scmp.eq.s32.totalorder %s21, 1
      %p112 = por %p110, %p111
      %p114 = scmp.ne.s32.totalorder %s97, %s113
      %p115 = scmp.eq.s32.totalorder %s21, 0
      %p116 = por %p114, %p115
      %p117 = scmp.le.s32.totalorder 1, %s15
      %p118 = scmp.lt.s32.totalorder %s15, 3
      %p119 = pnand %p117, %p118
      %p120 = pneg %p119
      // Predicated region
      $region9: #{tpu_custom_call.1} parent=5 // pred_check
        _
      $region10: #{tpu_custom_call.1} parent=5 // pred_check_branch
        %122 = sbr.rel (%p119) target = $region12
      $region11: #{tpu_custom_call.1} parent=5 // pred_region
        %s123 = ssub.s32 %s15, 1
        // Predicated region
        $region13: #{tpu_custom_call.1} parent=11 // pred_check
          %p124 = pneg %p53
        $region14: #{tpu_custom_call.1} parent=11 // pred_check_branch
          %126 = sbr.rel (%p124) target = $region16
        $region15: #{tpu_custom_call.1} parent=11 // pred_region
          %s128 = ssub.s32 16, 16
          %129 = vsyncadd [#allocation3], %s128
          %s130 = smul.addr %s25, 16
          %s131 = scalar_lea.hbm %s0, %s130
          %s133 = sshll.u32 [#allocation2], 4
          %s134 = int_to_ptr.vmem [resolvable:$true] %s133
          %136 = dma.hbm_to_vmem [thread:$0]  %s131, 16, %s134, [#allocation3]
        $region16: #{tpu_custom_call.1} parent=11 // pred_fallthru
          _
      $region12: #{tpu_custom_call.1} parent=5 // pred_fallthru
        _
      %p137 = scmp.lt.s32.totalorder %s15, 2
      // Predicated region
      $region17: #{tpu_custom_call.1} parent=5 // pred_check
        %p138 = pneg %p137
      $region18: #{tpu_custom_call.1} parent=5 // pred_check_branch
        %140 = sbr.rel (%p138) target = $region20
      $region19: #{tpu_custom_call.1} parent=5 // pred_region
        // Predicated region
        $region21: #{tpu_custom_call.1} parent=19 // pred_check
          %p141 = pneg %p75
        $region22: #{tpu_custom_call.1} parent=19 // pred_check_branch
          %143 = sbr.rel (%p141) target = $region24
        $region23: #{tpu_custom_call.1} parent=19 // pred_region
          %s144 = sand.u32 %s65, 1
          %s145 = scalar_lea.sflag [#allocation6], %s144
          %s146 = sand.u32 %s65, 1
          %s147 = smul.addr %s146, 8
          %s148 = scalar_lea.vmem [#allocation5], %s147
          %s150 = ssub.s32 128, 128
          %151 = vsyncadd %s145, %s150
          %s152 = sadd.s32 %s23, %s22
          %s153 = smul.addr %s152, 128
          %s154 = scalar_lea.hbm %s1, %s153
          %s156 = sshll.u32 %s148, 4
          %s157 = int_to_ptr.vmem [resolvable:$true] %s156
          %159 = dma.hbm_to_vmem [thread:$0]  %s154, 128, %s157, %s145
        $region24: #{tpu_custom_call.1} parent=19 // pred_fallthru
          _
      $region20: #{tpu_custom_call.1} parent=5 // pred_fallthru
        _
      %p160 = scmp.le.s32.totalorder 1, %s15
      %p161 = scmp.lt.s32.totalorder %s15, 3
      %p162 = pnand %p160, %p161
      %p163 = pneg %p162
      // Predicated region
      $region25: #{tpu_custom_call.1} parent=5 // pred_check
        _
      $region26: #{tpu_custom_call.1} parent=5 // pred_check_branch
        %165 = sbr.rel (%p162) target = $region28
      $region27: #{tpu_custom_call.1} parent=5 // pred_region
        %s166 = ssub.s32 %s15, 1
        // Predicated region
        $region29: #{tpu_custom_call.1} parent=27 // pred_check
          %p167 = pneg %p53
        $region30: #{tpu_custom_call.1} parent=27 // pred_check_branch
          %169 = sbr.rel (%p167) target = $region32
        $region31: #{tpu_custom_call.1} parent=27 // pred_region
          %170 = dma.done [#allocation3], 16
        $region32: #{tpu_custom_call.1} parent=27 // pred_fallthru
          _
        %s171 = sand.u32 %s68, 1
        %s172 = scalar_lea.sflag [#allocation6], %s171
        %s173 = sand.u32 %s68, 1
        %s174 = smul.addr %s173, 8
        %s175 = scalar_lea.vmem [#allocation5], %s174
        // Predicated region
        $region33: #{tpu_custom_call.1} parent=27 // pred_check
          %p176 = pneg %p81
        $region34: #{tpu_custom_call.1} parent=27 // pred_check_branch
          %178 = sbr.rel (%p176) target = $region36
        $region35: #{tpu_custom_call.1} parent=27 // pred_region
          %179 = dma.done %s172, 128
        $region36: #{tpu_custom_call.1} parent=27 // pred_fallthru
          _
        %p180 = pneg %p53
        %p181 = pneg %p50
        %s182 = sand.u32 %s68, 1
        %s183 = scalar_lea.sflag [#allocation6], %s182
        %s184 = sand.u32 %s68, 1
        %s185 = smul.addr %s184, 8
        %s186 = scalar_lea.vmem [#allocation5], %s185
        %p187 = pneg %p81
        %p188 = pneg %p78
        %p189 = pneg %p109
        %p190 = pneg %p106
        %s191 = sand.u32 %s96, 1
        %s192 = scalar_lea.sflag [#allocation4], %s191
        %s193 = sand.u32 %s96, 1
        %s194 = smul.addr %s193, 8
        %s195 = scalar_lea.vmem [#allocation7], %s194
        %v196 = vld [vmem:[#allocation2] sm:$0x1]
        %v197 = vmul.f32 %v196, 1.442695
        %v198 = vpow.pop %v197
        %v199 = vld [vmem:[%s175] sm:$0xff]
        %v201 = vlaneseq
        %v202 = vshrl.u32 %v201, 7
        %v203 = vsub.s32 0, %v202
        %v204 = vrot.slane %v198, %v203
        %v206 = vmul.f32 %v199, %v204
        %207 = vst [vmem:[%s195] sm:$0xff] %v206
        %s208 = sand.u32 %s96, 1
        %s209 = scalar_lea.sflag [#allocation4], %s208
        %s210 = sand.u32 %s96, 1
        %s211 = smul.addr %s210, 8
        %s212 = scalar_lea.vmem [#allocation7], %s211
        // Predicated region
        $region37: #{tpu_custom_call.1} parent=27 // pred_check
          %p213 = pneg %p106
        $region38: #{tpu_custom_call.1} parent=27 // pred_check_branch
          %215 = sbr.rel (%p213) target = $region40
        $region39: #{tpu_custom_call.1} parent=27 // pred_region
          %s217 = ssub.s32 128, 128
          %218 = vsyncadd %s209, %s217
          %s219 = sadd.s32 %s25, %s24
          %s220 = smul.addr %s219, 128
          %s221 = scalar_lea.hbm %s2, %s220
          %s223 = sshll.u32 %s212, 4
          %s224 = int_to_ptr.vmem [resolvable:$true] %s223
          %226 = dma.vmem_to_hbm [thread:$0]  %s224, 128, %s221, %s209
        $region40: #{tpu_custom_call.1} parent=27 // pred_fallthru
          _
      $region28: #{tpu_custom_call.1} parent=5 // pred_fallthru
        _
      %p227 = scmp.le.s32.totalorder 2, %s15
      // Predicated region
      $region41: #{tpu_custom_call.1} parent=5 // pred_check
        %p228 = pneg %p227
      $region42: #{tpu_custom_call.1} parent=5 // pred_check_branch
        %230 = sbr.rel (%p228) target = $region44
      $region43: #{tpu_custom_call.1} parent=5 // pred_region
        %s231 = ssub.s32 %s15, 2
        // Predicated region
        $region45: #{tpu_custom_call.1} parent=43 // pred_check
          %p232 = pneg %p112
        $region46: #{tpu_custom_call.1} parent=43 // pred_check_branch
          %234 = sbr.rel (%p232) target = $region48
        $region47: #{tpu_custom_call.1} parent=43 // pred_region
          %s235 = sand.u32 %s97, 1
          %s236 = scalar_lea.sflag [#allocation4], %s235
          %s237 = sand.u32 %s97, 1
          %s238 = smul.addr %s237, 8
          %s239 = scalar_lea.vmem [#allocation7], %s238
          %240 = dma.done %s236, 128
        $region48: #{tpu_custom_call.1} parent=43 // pred_fallthru
          _
      $region44: #{tpu_custom_call.1} parent=5 // pred_fallthru
        _
    $region6: #{tpu_custom_call.1} parent=1 // loop_footer
      %s19 = sadd.s32 1, %s15
    $region7: #{tpu_custom_call.1} parent=1 // loop_footer_branch
      %14 = sbr.rel target = $region3
    $region8: #{tpu_custom_call.1} parent=1 // loop_exit
      _
    %241 = vsyncpa [#allocation3], 1
    %s242 = scalar_lea.sflag [#allocation3], 1
    %243 = vsyncpa %s242, 1
    %244 = vsyncpa [#allocation6], 1
    %s245 = scalar_lea.sflag [#allocation6], 1
    %246 = vsyncpa %s245, 1
    %247 = vsyncpa [#allocation4], 1
    %s248 = scalar_lea.sflag [#allocation4], 1
    %249 = vsyncpa %s248, 1

</llo_original>
